<compile_context>
chip_gen: v7x
topology: tpu7x:2x2x1
jax: 0.10.0
libtpu: 0.0.40
codegen_flags: <defaults>
</compile_context>

<pallas_src>
import functools

import jax
import jax.numpy as jnp
from jax.experimental import pallas as pl
from jax.experimental.pallas import tpu as pltpu

MODULE_FACTOR = 0.5   # module_factor of the ResidualConnectionModule instance
INPUT_FACTOR = 1.0    # input_factor


def _round_up(x, m):
    return (x + m - 1) // m * m


def fold_module_factor(w, b, module_factor):
    """One-time parameter transform (done at init, not per call):
    module(x) * module_factor == x @ (w * mf) + (b * mf)."""
    return w * module_factor, b * module_factor


# ----------------------------- kernels --------------------------------------

def _residual_linear_kernel_single_n(x_ref, w_ref, b_ref, o_ref, *, input_factor):
    # x_ref: (TM, Hp)  w_ref: (Hp, Hp)  b_ref: (1, Hp)  o_ref: (TM, Hp)
    x = x_ref[...]
    acc = jnp.dot(x, w_ref[...], preferred_element_type=jnp.float32)
    acc = acc + b_ref[...].astype(jnp.float32)
    res = x.astype(jnp.float32)
    if input_factor != 1.0:          # trace-time constant; elided when == 1.0
        res = res * input_factor
    o_ref[...] = (acc + res).astype(o_ref.dtype)


def _residual_linear_kernel_tiled_n(x_ref, xres_ref, w_ref, b_ref, o_ref, *,
                                    input_factor):
    # x_ref: (TM, Hp)  xres_ref: (TM, TN)  w_ref: (Hp, TN)  b_ref: (1, TN)
    # o_ref: (TM, TN)
    acc = jnp.dot(x_ref[...], w_ref[...], preferred_element_type=jnp.float32)
    acc = acc + b_ref[...].astype(jnp.float32)
    res = xres_ref[...].astype(jnp.float32)
    if input_factor != 1.0:
        res = res * input_factor
    o_ref[...] = (acc + res).astype(o_ref.dtype)


# ----------------------------- wrapper ---------------------------------------

def residual_connection_linear(x, w_scaled, b_scaled, *,
                               input_factor=INPUT_FACTOR,
                               tm_target=512,
                               tn_target=512,
                               force_n_tiling=False,
                               weight_resident_bytes=8 * 1024 * 1024):
    """Fused  out = x @ w_scaled + b_scaled + input_factor * x.

    x: (B, S, H).  w_scaled/b_scaled must already have module_factor folded in
    (see fold_module_factor) -- a one-time init transform.
    """
    B, S, H = x.shape
    M = B * S
    dtype = x.dtype

    # ---- pad to TPU-friendly shapes: lane dim multiple of 128, row tiles of 8
    Hp = _round_up(H, 128)
    tm_target = max(8, _round_up(tm_target, 8))
    TM = min(tm_target, _round_up(M, 8))
    Mp = _round_up(M, TM)
    nM = Mp // TM

    x2 = x.reshape(M, H)
    if (Mp, Hp) != (M, H):
        x2 = jnp.pad(x2, ((0, Mp - M), (0, Hp - H)))
    w2 = w_scaled
    if w_scaled.shape != (Hp, Hp):
        w2 = jnp.pad(w_scaled, ((0, Hp - H), (0, Hp - H)))
    b2 = b_scaled.reshape(1, H)
    if Hp != H:
        b2 = jnp.pad(b2, ((0, 0), (0, Hp - H)))

    # Keep the full weight VMEM-resident when small; otherwise tile the
    # output-hidden (N) axis so the kernel scales on v7x's 64 MiB VMEM.
    w_itembytes = jnp.dtype(w2.dtype).itemsize
    act_bytes = jnp.dtype(dtype).itemsize
    use_n_tiling = force_n_tiling or (Hp * Hp * w_itembytes > weight_resident_bytes)
    if use_n_tiling:
        TN = tn_target if Hp % tn_target == 0 else (256 if Hp % 256 == 0 else 128)
    else:
        TN = Hp
    nN = Hp // TN

    # ---- VMEM budget (double-buffered) + advisory cost estimate
    vmem_est = 2 * (TM * Hp + TM * TN) * act_bytes + 2 * (Hp * TN + TN) * w_itembytes
    if nN > 1:
        vmem_est += 2 * TM * TN * act_bytes
    vmem_limit = int(min(64 << 20, max(vmem_est + (4 << 20), 32 << 20)))

    flops = 2 * Mp * Hp * Hp
    bytes_accessed = (x2.size * act_bytes * (2 if nN > 1 else 1)
                      + w2.size * w_itembytes * (nM if nN > 1 else 1)
                      + b2.size * w_itembytes
                      + Mp * Hp * act_bytes)
    cost = pl.CostEstimate(flops=flops, transcendentals=0,
                           bytes_accessed=int(bytes_accessed))

    if nN == 1:
        kernel = functools.partial(_residual_linear_kernel_single_n,
                                   input_factor=float(input_factor))
        grid = (nM,)
        in_specs = [
            pl.BlockSpec((TM, Hp), lambda i: (i, 0)),
            pl.BlockSpec((Hp, Hp), lambda i: (0, 0)),   # weights VMEM-resident
            pl.BlockSpec((1, Hp), lambda i: (0, 0)),
        ]
        out_specs = pl.BlockSpec((TM, Hp), lambda i: (i, 0))
        operands = (x2, w2, b2)
        dim_sem = ("parallel",)
    else:
        kernel = functools.partial(_residual_linear_kernel_tiled_n,
                                   input_factor=float(input_factor))
        grid = (nM, nN)
        in_specs = [
            pl.BlockSpec((TM, Hp), lambda i, j: (i, 0)),  # full-K activations
            pl.BlockSpec((TM, TN), lambda i, j: (i, j)),  # residual column tile
            pl.BlockSpec((Hp, TN), lambda i, j: (0, j)),
            pl.BlockSpec((1, TN), lambda i, j: (0, j)),
        ]
        out_specs = pl.BlockSpec((TM, TN), lambda i, j: (i, j))
        operands = (x2, x2, w2, b2)
        dim_sem = ("parallel", "parallel")

    out2 = pl.pallas_call(
        kernel,
        out_shape=jax.ShapeDtypeStruct((Mp, Hp), dtype),
        grid_spec=pltpu.PrefetchScalarGridSpec(
            num_scalar_prefetch=0,
            grid=grid,
            in_specs=in_specs,
            out_specs=out_specs,
        ),
        compiler_params=pltpu.CompilerParams(
            dimension_semantics=dim_sem,
            vmem_limit_bytes=vmem_limit,
        ),
        cost_estimate=cost,
    )(*operands)

    return out2[:M, :H].reshape(B, S, H)


# ----------------------------- test ------------------------------------------

if __name__ == "__main__":
    key = jax.random.PRNGKey(0)
    kx, kw, kb, kx2, kw2, kb2 = jax.random.split(key, 6)

    # ---- test 1: toy shape (B=2, S=8, H=32), float32 -------------------------
    B, S, H = 2, 8, 32
    x = jax.random.normal(kx, (B, S, H), dtype=jnp.float32)
    w = jax.random.normal(kw, (H, H), dtype=jnp.float32) * 0.05
    b = jax.random.normal(kb, (H,), dtype=jnp.float32) * 0.05
    ws, bs = fold_module_factor(w, b, MODULE_FACTOR)

    out = residual_connection_linear(x, ws, bs, input_factor=INPUT_FACTOR)
    jax.block_until_ready(out)

    ref = (x @ w + b) * MODULE_FACTOR + x * INPUT_FACTOR
    assert out.shape == x.shape
    # MXU default precision on f32 operands + K-padding can reorder the f32
    # accumulation; 1e-3 still catches any factor/bias/layout bug by orders
    # of magnitude.
    assert jnp.allclose(out, ref, atol=1e-3, rtol=1e-3), "f32 mismatch vs reference"

    # ---- test 2: exercise M tiling, N tiling and ragged padding, bfloat16 ----
    B2, S2, H2 = 2, 25, 192          # M=50 (ragged vs TM=16), H pads 192 -> 256
    xb = jax.random.normal(kx2, (B2, S2, H2), dtype=jnp.bfloat16)
    wb = (jax.random.normal(kw2, (H2, H2), dtype=jnp.float32) * 0.05).astype(jnp.bfloat16)
    bb = (jax.random.normal(kb2, (H2,), dtype=jnp.float32) * 0.05).astype(jnp.bfloat16)
    wbs, bbs = fold_module_factor(wb, bb, MODULE_FACTOR)

    out_b = residual_connection_linear(
        xb, wbs, bbs, input_factor=INPUT_FACTOR,
        tm_target=16, tn_target=128, force_n_tiling=True)
    jax.block_until_ready(out_b)

    ref_b = ((xb.astype(jnp.float32) @ wb.astype(jnp.float32)
              + bb.astype(jnp.float32)) * MODULE_FACTOR
             + xb.astype(jnp.float32) * INPUT_FACTOR)
    assert out_b.shape == xb.shape
    assert jnp.allclose(out_b.astype(jnp.float32), ref_b, atol=2e-2, rtol=2e-2), \
        "bf16 mismatch vs reference"

    print("KERNEL_OK")
</pallas_src>

<mosaic_0001>
module attributes {stable_mosaic.version = 11 : i64} {
  func.func @_residual_linear_kernel_single_n(%arg0: i32, %arg1: memref<16x128xf32, #tpu.memory_space<vmem>>, %arg2: memref<128x128xf32, #tpu.memory_space<vmem>>, %arg3: memref<1x128xf32, #tpu.memory_space<vmem>>, %arg4: memref<16x128xf32, #tpu.memory_space<vmem>>) attributes {dimension_semantics = [#tpu.dimension_semantics<parallel>], iteration_bounds = array<i64: 1>, scalar_prefetch = 0 : i64, scratch_operands = 0 : i64, tpu.core_type = #tpu.core_type<tc>, window_params = [{transform_indices = @transform_0, window_bounds = array<i64: 16, 128>}, {pipeline_mode = #tpu.pipeline_mode<synchronous>, transform_indices = @transform_1, window_bounds = array<i64: 128, 128>}, {pipeline_mode = #tpu.pipeline_mode<synchronous>, transform_indices = @transform_2, window_bounds = array<i64: 1, 128>}, {transform_indices = @transform_3, window_bounds = array<i64: 16, 128>}]} {
    %c0 = arith.constant 0 : index
    %c0_0 = arith.constant 0 : index
    %0 = vector.load %arg1[%c0, %c0_0] : memref<16x128xf32, #tpu.memory_space<vmem>>, vector<16x128xf32>
    %c0_1 = arith.constant 0 : index
    %c0_2 = arith.constant 0 : index
    %1 = vector.load %arg2[%c0_1, %c0_2] : memref<128x128xf32, #tpu.memory_space<vmem>>, vector<128x128xf32>
    %cst = arith.constant dense<0.000000e+00> : vector<16x128xf32>
    %2 = tpu.matmul %0, %1, %cst {dimension_numbers = #tpu.dot_dimension_numbers<[1], [0], [0], [1], [0, 0, 1, 1], [], []>} : vector<16x128xf32>, vector<128x128xf32>, vector<16x128xf32> -> vector<16x128xf32>
    %c0_3 = arith.constant 0 : index
    %c0_4 = arith.constant 0 : index
    %3 = vector.load %arg3[%c0_3, %c0_4] : memref<1x128xf32, #tpu.memory_space<vmem>>, vector<1x128xf32>
    %4 = vector.broadcast %3 : vector<1x128xf32> to vector<16x128xf32>
    %5 = arith.addf %2, %4 : vector<16x128xf32>
    %6 = arith.addf %5, %0 : vector<16x128xf32>
    %c0_5 = arith.constant 0 : index
    %c0_6 = arith.constant 0 : index
    %7 = vector.load %arg4[%c0_5, %c0_6] : memref<16x128xf32, #tpu.memory_space<vmem>>, vector<16x128xf32>
    tpu.vector_store %arg4[%c0_5, %c0_6], %6 {strides = array<i32>} : memref<16x128xf32, #tpu.memory_space<vmem>>, vector<16x128xf32>,
    return
  }
  func.func @transform_0(%arg0: i32) -> (i32, i32) {
    %c0_i32 = arith.constant 0 : i32
    %c0_i32_0 = arith.constant 0 : i32
    return %arg0, %c0_i32 : i32, i32
  }
  func.func @transform_1(%arg0: i32) -> (i32, i32) {
    %c0_i32 = arith.constant 0 : i32
    %c0_i32_0 = arith.constant 0 : i32
    %c0_i32_1 = arith.constant 0 : i32
    return %c0_i32, %c0_i32_0 : i32, i32
  }
  func.func @transform_2(%arg0: i32) -> (i32, i32) {
    %c0_i32 = arith.constant 0 : i32
    %c0_i32_0 = arith.constant 0 : i32
    %c0_i32_1 = arith.constant 0 : i32
    return %c0_i32, %c0_i32_0 : i32, i32
  }
  func.func @transform_3(%arg0: i32) -> (i32, i32) {
    %c0_i32 = arith.constant 0 : i32
    %c0_i32_0 = arith.constant 0 : i32
    return %arg0, %c0_i32 : i32, i32
  }
}

</mosaic_0001>

<llo_original>
// kernel: tpu_custom_call.1
$region0: #{tpu_custom_call.1}
  #allocation0 [shape = 'u32[]', space=smem, size = 0x4, offset = 0x4, fixed_abs, tag = 'smem constant byte address 0x4 - core index']
  #allocation1 [shape = 'u32[144,128]{1,0:T(1,128)}', space=vmem, size = 0x12000, scoped, tag = 'internal scratch']
  %s0 = inlined_call_operand.hbm [shape: f32[16,128], index: 0, kind: input, shape index: {}]
  %s1 = inlined_call_operand.hbm [shape: f32[128,128], index: 1, kind: input, shape index: {}]
  %s2 = inlined_call_operand.vmem [shape: f32[1,128], index: 2, kind: input, shape index: {}]
  %s3 = inlined_call_operand.hbm [shape: f32[16,128], index: 3, kind: output, shape index: {}]
  %s4 = sld [smem:[#allocation0]]
  $region30: #{tpu_custom_call.1} parent=0
    _
  %s6 = ssub.s32 1, %s4
  %s7 = scalar_select 0, %s6, %s4
  $region1: #{tpu_custom_call.1} parent=0
    #allocation2 [shape = 'u8[8192]{0}', space=vmem, size = 0x2000, scoped, tag = 'input window, operand 0, single buffered']
    #allocation3 [shape = 's32[1]{0}', space=sflag, size = 0x4, scoped, tag = 'scoped memory for tpu_custom_call.1']
    #allocation4 [shape = 's32[1]{0}', space=sflag, size = 0x4, scoped, tag = 'scoped memory for tpu_custom_call.1']
    #allocation5 [shape = 'u8[65536]{0}', space=vmem, size = 0x10000, scoped, tag = 'input window, operand 1, single buffered']
    #allocation6 [shape = 's32[1]{0}', space=sflag, size = 0x4, scoped, tag = 'scoped memory for tpu_custom_call.1']
    #allocation7 [shape = 'u8[8192]{0}', space=vmem, size = 0x2000, scoped, tag = 'output window, operand 0, single buffered']
    %8 = vsyncpa [#allocation3], 0
    %9 = vsyncpa [#allocation6], 0
    %10 = vsyncpa [#allocation4], 0
    // Predicated region
    $region2: #{tpu_custom_call.1} parent=1 // pred_check
      _
    $region3: #{tpu_custom_call.1} parent=1 // pred_check_branch
      %12 = sbr.rel (0) target = $region5
    $region4: #{tpu_custom_call.1} parent=1 // pred_region
      %s14 = ssub.s32 256, 256
      %15 = vsyncadd [#allocation3], %s14
      %s16 = sshll.u32 [#allocation2], 4
      %s17 = int_to_ptr.vmem [resolvable:$true] %s16
      %22 = dma.hbm_to_vmem [thread:$0]  %s0, 256, %s17, [#allocation3], 128, 128, 8
    $region5: #{tpu_custom_call.1} parent=1 // pred_fallthru
      _
    // Predicated region
    $region6: #{tpu_custom_call.1} parent=1 // pred_check
      _
    $region7: #{tpu_custom_call.1} parent=1 // pred_check_branch
      %24 = sbr.rel (0) target = $region9
    $region8: #{tpu_custom_call.1} parent=1 // pred_region
      %s26 = ssub.s32 2048, 2048
      %27 = vsyncadd [#allocation6], %s26
      %s28 = sshll.u32 [#allocation5], 4
      %s29 = int_to_ptr.vmem [resolvable:$true] %s28
      %34 = dma.hbm_to_vmem [thread:$0]  %s1, 2048, %s29, [#allocation6], 128, 128, 8
    $region9: #{tpu_custom_call.1} parent=1 // pred_fallthru
      _
    // Predicated region
    $region10: #{tpu_custom_call.1} parent=1 // pred_check
      _
    $region11: #{tpu_custom_call.1} parent=1 // pred_check_branch
      %36 = sbr.rel (0) target = $region13
    $region12: #{tpu_custom_call.1} parent=1 // pred_region
      _
    $region13: #{tpu_custom_call.1} parent=1 // pred_fallthru
      _
    // Predicated region
    $region14: #{tpu_custom_call.1} parent=1 // pred_check
      _
    $region15: #{tpu_custom_call.1} parent=1 // pred_check_branch
      %38 = sbr.rel (0) target = $region17
    $region16: #{tpu_custom_call.1} parent=1 // pred_region
      %39 = dma.done [#allocation3], 256
    $region17: #{tpu_custom_call.1} parent=1 // pred_fallthru
      _
    // Predicated region
    $region18: #{tpu_custom_call.1} parent=1 // pred_check
      _
    $region19: #{tpu_custom_call.1} parent=1 // pred_check_branch
      %41 = sbr.rel (0) target = $region21
    $region20: #{tpu_custom_call.1} parent=1 // pred_region
      %42 = dma.done [#allocation6], 2048
    $region21: #{tpu_custom_call.1} parent=1 // pred_fallthru
      _
    %v43 = vld [vmem:[#allocation2] sm:$0xff]
    %v44 = vld [vmem:[#allocation2 + $0x8] sm:$0xff]
    %v45 = vld [vmem:[#allocation5] sm:$0xff]
    %v46 = vld [vmem:[#allocation5 + $0x8] sm:$0xff]
    %v47 = vld [vmem:[#allocation5 + $0x10] sm:$0xff]
    %v48 = vld [vmem:[#allocation5 + $0x18] sm:$0xff]
    %v49 = vld [vmem:[#allocation5 + $0x20] sm:$0xff]
    %v50 = vld [vmem:[#allocation5 + $0x28] sm:$0xff]
    %v51 = vld [vmem:[#allocation5 + $0x30] sm:$0xff]
    %v52 = vld [vmem:[#allocation5 + $0x38] sm:$0xff]
    %v53 = vld [vmem:[#allocation5 + $0x40] sm:$0xff]
    %v54 = vld [vmem:[#allocation5 + $0x48] sm:$0xff]
    %v55 = vld [vmem:[#allocation5 + $0x50] sm:$0xff]
    %v56 = vld [vmem:[#allocation5 + $0x58] sm:$0xff]
    %v57 = vld [vmem:[#allocation5 + $0x60] sm:$0xff]
    %v58 = vld [vmem:[#allocation5 + $0x68] sm:$0xff]
    %v59 = vld [vmem:[#allocation5 + $0x70] sm:$0xff]
    %v60 = vld [vmem:[#allocation5 + $0x78] sm:$0xff]
    %v61 = vld [vmem:[%s2] sm:$0x1]
    %v63 = vlaneseq
    %v64 = vshrl.u32 %v63, 7
    %v65 = vsub.s32 0, %v64
    %v66 = vrot.slane %v61, %v65
    %68 = vmatprep.subr.mxu0 0.0
    %69 = vmatpush1.msra.mxu0 %v45
    %70 = vmatprep.subr.mxu0 0.0
    %71 = vmatpush1.msra.mxu0 %v46
    %72 = vmatprep.subr.mxu0 0.0
    %73 = vmatpush1.msra.mxu0 %v47
    %74 = vmatprep.subr.mxu0 0.0
    %75 = vmatpush1.msra.mxu0 %v48
    %76 = vmatprep.subr.mxu0 0.0
    %77 = vmatpush1.msra.mxu0 %v49
    %78 = vmatprep.subr.mxu0 0.0
    %79 = vmatpush1.msra.mxu0 %v50
    %80 = vmatprep.subr.mxu0 0.0
    %81 = vmatpush1.msra.mxu0 %v51
    %82 = vmatprep.subr.mxu0 0.0
    %83 = vmatpush1.msra.mxu0 %v52
    %84 = vmatprep.subr.mxu0 0.0
    %85 = vmatpush1.msra.mxu0 %v53
    %86 = vmatprep.subr.mxu0 0.0
    %87 = vmatpush1.msra.mxu0 %v54
    %88 = vmatprep.subr.mxu0 0.0
    %89 = vmatpush1.msra.mxu0 %v55
    %90 = vmatprep.subr.mxu0 0.0
    %91 = vmatpush1.msra.mxu0 %v56
    %92 = vmatprep.subr.mxu0 0.0
    %93 = vmatpush1.msra.mxu0 %v57
    %94 = vmatprep.subr.mxu0 0.0
    %95 = vmatpush1.msra.mxu0 %v58
    %96 = vmatprep.subr.mxu0 0.0
    %97 = vmatpush1.msra.mxu0 %v59
    %98 = vmatprep.subr.mxu0 0.0
    %99 = vmatpush1.msra.mxu0 %v60
    %100 = vmatprep.subr.mxu0 0.0
    %101 = vmatpush1.msra.mxu0 0.0
    %102 = vmatprep.subr.mxu0 0.0
    %103 = vmatpush1.msra.mxu0 0.0
    %104 = vmatprep.subr.mxu0 0.0
    %105 = vmatpush1.msra.mxu0 0.0
    %106 = vmatprep.subr.mxu0 0.0
    %107 = vmatpush1.msra.mxu0 0.0
    %108 = vmatprep.subr.mxu0 0.0
    %109 = vmatpush1.msra.mxu0 0.0
    %110 = vmatprep.subr.mxu0 0.0
    %111 = vmatpush1.msra.mxu0 0.0
    %112 = vmatprep.subr.mxu0 0.0
    %113 = vmatpush1.msra.mxu0 0.0
    %114 = vmatprep.subr.mxu0 0.0
    %115 = vmatpush1.msra.mxu0 0.0
    %116 = vmatprep.subr.mxu0 0.0
    %117 = vmatpush1.msra.mxu0 0.0
    %118 = vmatprep.subr.mxu0 0.0
    %119 = vmatpush1.msra.mxu0 0.0
    %120 = vmatprep.subr.mxu0 0.0
    %121 = vmatpush1.msra.mxu0 0.0
    %122 = vmatprep.subr.mxu0 0.0
    %123 = vmatpush1.msra.mxu0 0.0
    %124 = vmatprep.subr.mxu0 0.0
    %125 = vmatpush1.msra.mxu0 0.0
    %126 = vmatprep.subr.mxu0 0.0
    %127 = vmatpush1.msra.mxu0 0.0
    %128 = vmatprep.subr.mxu0 0.0
    %129 = vmatpush1.msra.mxu0 0.0
    %130 = vmatprep.subr.mxu0 0.0
    %131 = vmatpush1.msra.mxu0 0.0
    %132 = vmatprep.mubr.f32.mxu0 0.0
    %133 = vmatmul.mubr.f32.gmra.mrb[0].mxu0 %v43
    %v134 = vpop.f32.mrb[0].mxu0
    %v135 = vadd.f32 %v66, %v134
    %v136 = vpop.f32.mrb[0].mxu0
    %137 = vmatprep.mubr.f32.mxu0 0.0
    %138 = vmatmul.mubr.f32.gmra.mrb[0].mxu0 %v44
    %v139 = vpop.f32.mrb[0].mxu0
    %v140 = vadd.f32 %v66, %v139
    %v141 = vpop.f32.mrb[0].mxu0
    %142 = vdwg.mxu0
    %v143 = vadd.f32 %v135, %v43
    %v144 = vadd.f32 %v140, %v44
    %145 = vst [vmem:[#allocation7] sm:$0xff] %v143
    %146 = vst [vmem:[#allocation7 + $0x8] sm:$0xff] %v144
    // Predicated region
    $region22: #{tpu_custom_call.1} parent=1 // pred_check
      _
    $region23: #{tpu_custom_call.1} parent=1 // pred_check_branch
      %148 = sbr.rel (0) target = $region25
    $region24: #{tpu_custom_call.1} parent=1 // pred_region
      %s150 = ssub.s32 256, 256
      %151 = vsyncadd [#allocation4], %s150
      %s152 = sshll.u32 [#allocation7], 4
      %s153 = int_to_ptr.vmem [resolvable:$true] %s152
      %158 = dma.vmem_to_hbm [thread:$0]  %s153, 256, %s3, [#allocation4], 128, 128, 8
    $region25: #{tpu_custom_call.1} parent=1 // pred_fallthru
      _
    // Predicated region
    $region26: #{tpu_custom_call.1} parent=1 // pred_check
      _
    $region27: #{tpu_custom_call.1} parent=1 // pred_check_branch
      %160 = sbr.rel (0) target = $region29
    $region28: #{tpu_custom_call.1} parent=1 // pred_region
      %161 = dma.done [#allocation4], 256
    $region29: #{tpu_custom_call.1} parent=1 // pred_fallthru
      _
    %162 = vsyncpa [#allocation3], 1
    %163 = vsyncpa [#allocation6], 1
    %164 = vsyncpa [#allocation4], 1

</llo_original>
